<compile_context>
chip_gen: v7x
topology: tpu7x:2x2x1
jax: 0.10.0
libtpu: 0.0.40
codegen_flags: <defaults>
</compile_context>

<pallas_src>
import jax
import jax.numpy as jnp
from jax import lax
from jax.experimental import pallas as pl
from jax.experimental.pallas import tpu as pltpu

PARAMS = dict(
    gru_hidden_size=32,
    intention_cluster_num=8,
)


# ----------------------------------------------------------------------------
# Fused MLP kernel (single grid step, transposed / lane-dense layout).
#   x: (N, H)   w1: (H1, H)   b1: (H1, 1)   w2: (C, H1)   b2: (C, 1)
#   out: (C, N)   where  out = (ReLU(x @ W1^T + b1) @ W2^T + b2)^T
# ----------------------------------------------------------------------------
def intention_mlp_kernel(x_ref, w1_ref, b1_ref, w2_ref, b2_ref, out_ref):
    # hT[h1, n] = sum_h W1[h1, h] * x[n, h]   (contract last dim of both operands)
    hT = lax.dot_general(
        w1_ref[...], x_ref[...],
        dimension_numbers=(((1,), (1,)), ((), ())),
        preferred_element_type=jnp.float32)                       # (H1, N)
    hT = jnp.maximum(hT + b1_ref[...], 0.0)                       # Linear1 + ReLU
    oT = jnp.dot(w2_ref[...], hT, preferred_element_type=jnp.float32)  # (C, N)
    out_ref[...] = oT + b2_ref[...]                               # Linear2 (unmasked store)


# ----------------------------------------------------------------------------
# One-time parameter preparation (hoisted out of the per-call hot path).
# Weights keep their native PyTorch (out, in) layout; only biases are reshaped
# to column vectors so they broadcast across the lane (N) axis in-kernel.
# ----------------------------------------------------------------------------
def prepare_params(pw):
    return dict(
        w1=pw["w1"].astype(jnp.float32),                 # (H1, H)
        b1=pw["b1"].reshape(-1, 1).astype(jnp.float32),  # (H1, 1)
        w2=pw["w2"].astype(jnp.float32),                 # (C, H1)
        b2=pw["b2"].reshape(-1, 1).astype(jnp.float32),  # (C, 1)
    )


def intention_classifier_forward(decoder_hidden, kp):
    """decoder_hidden: (1, N, H) -> intention: (N, C)."""
    _, N, H = decoder_hidden.shape
    x = decoder_hidden.reshape(N, H)                     # squeeze(0) — free reshape
    H1 = kp["w1"].shape[0]
    C = kp["w2"].shape[0]

    out_t = pl.pallas_call(
        intention_mlp_kernel,
        out_shape=jax.ShapeDtypeStruct((C, N), jnp.float32),
        grid=(1,),                                       # single step: overhead-bound shape
        in_specs=[
            pl.BlockSpec((N, H), lambda i: (0, 0)),
            pl.BlockSpec((H1, H), lambda i: (0, 0)),
            pl.BlockSpec((H1, 1), lambda i: (0, 0)),
            pl.BlockSpec((C, H1), lambda i: (0, 0)),
            pl.BlockSpec((C, 1), lambda i: (0, 0)),
        ],
        out_specs=pl.BlockSpec((C, N), lambda i: (0, 0)),
        compiler_params=pltpu.CompilerParams(
            dimension_semantics=("arbitrary",)),
    )(x, kp["w1"], kp["b1"], kp["w2"], kp["b2"])

    # Restore module semantics (N, C); tiny (8, N) transpose, fuses under jit.
    return out_t.T


# ----------------------------------------------------------------------------
# Deterministic parameter init (PyTorch-style uniform(-1/sqrt(fan_in), ...)),
# in the original nn.Linear (out, in) layout.
# ----------------------------------------------------------------------------
def init_params(key, p):
    H = p["gru_hidden_size"]
    H1 = H // 2
    C = p["intention_cluster_num"]
    k1, k2, k3, k4 = jax.random.split(key, 4)
    lim1 = 1.0 / (H ** 0.5)
    lim2 = 1.0 / (H1 ** 0.5)
    return dict(
        w1=jax.random.uniform(k1, (H1, H), jnp.float32, -lim1, lim1),
        b1=jax.random.uniform(k2, (H1,), jnp.float32, -lim1, lim1),
        w2=jax.random.uniform(k3, (C, H1), jnp.float32, -lim2, lim2),
        b2=jax.random.uniform(k4, (C,), jnp.float32, -lim2, lim2),
    )


# ----------------------------------------------------------------------------
# Pure-JAX reference for correctness checking.
# ----------------------------------------------------------------------------
def reference_forward(decoder_hidden, pw):
    x = decoder_hidden[0]                                # squeeze(0)
    h = jnp.maximum(x @ pw["w1"].T + pw["b1"], 0.0)
    return h @ pw["w2"].T + pw["b2"]


if __name__ == "__main__":
    key = jax.random.PRNGKey(0)
    H = PARAMS["gru_hidden_size"]
    C = PARAMS["intention_cluster_num"]

    # N = sample_num * batch_size * ped_num = 4 * 2 * 16 = 128
    sample_num, batch_size, ped_num = 4, 2, 16
    N = sample_num * batch_size * ped_num

    key, kx, kp_key = jax.random.split(key, 3)
    decoder_hidden = jax.random.normal(kx, (1, N, H), jnp.float32)

    pw = init_params(kp_key, PARAMS)                     # PyTorch-layout params
    kp = prepare_params(pw)                              # kernel-ready (done once)

    fwd = jax.jit(intention_classifier_forward)
    out = jax.block_until_ready(fwd(decoder_hidden, kp))

    ref = reference_forward(decoder_hidden, pw)
    assert out.shape == (N, C), out.shape
    max_err = float(jnp.max(jnp.abs(out - ref)))
    assert jnp.allclose(out, ref, atol=1e-5, rtol=1e-5), max_err

    print("KERNEL_OK")
</pallas_src>

<mosaic_0001>
module attributes {stable_mosaic.version = 11 : i64} {
  func.func @intention_mlp_kernel(%arg0: i32, %arg1: memref<128x32xf32, #tpu.memory_space<vmem>>, %arg2: memref<16x32xf32, #tpu.memory_space<vmem>>, %arg3: memref<16x1xf32, #tpu.memory_space<vmem>>, %arg4: memref<8x16xf32, #tpu.memory_space<vmem>>, %arg5: memref<8x1xf32, #tpu.memory_space<vmem>>, %arg6: memref<8x128xf32, #tpu.memory_space<vmem>>) attributes {dimension_semantics = [#tpu.dimension_semantics<arbitrary>], iteration_bounds = array<i64: 1>, scalar_prefetch = 0 : i64, scratch_operands = 0 : i64, tpu.core_type = #tpu.core_type<tc>, window_params = [{pipeline_mode = #tpu.pipeline_mode<synchronous>, transform_indices = @transform_0, window_bounds = array<i64: 128, 32>}, {pipeline_mode = #tpu.pipeline_mode<synchronous>, transform_indices = @transform_1, window_bounds = array<i64: 16, 32>}, {pipeline_mode = #tpu.pipeline_mode<synchronous>, transform_indices = @transform_2, window_bounds = array<i64: 16, 1>}, {pipeline_mode = #tpu.pipeline_mode<synchronous>, transform_indices = @transform_3, window_bounds = array<i64: 8, 16>}, {pipeline_mode = #tpu.pipeline_mode<synchronous>, transform_indices = @transform_4, window_bounds = array<i64: 8, 1>}, {pipeline_mode = #tpu.pipeline_mode<synchronous>, transform_indices = @transform_5, window_bounds = array<i64: 8, 128>}]} {
    %c0 = arith.constant 0 : index
    %c0_0 = arith.constant 0 : index
    %0 = vector.load %arg2[%c0, %c0_0] : memref<16x32xf32, #tpu.memory_space<vmem>>, vector<16x32xf32>
    %c0_1 = arith.constant 0 : index
    %c0_2 = arith.constant 0 : index
    %1 = vector.load %arg1[%c0_1, %c0_2] : memref<128x32xf32, #tpu.memory_space<vmem>>, vector<128x32xf32>
    %cst = arith.constant dense<0.000000e+00> : vector<16x128xf32>
    %2 = tpu.matmul %0, %1, %cst {dimension_numbers = #tpu.dot_dimension_numbers<[1], [1], [0], [0], [0, 0, 1, 0], [], []>} : vector<16x32xf32>, vector<128x32xf32>, vector<16x128xf32> -> vector<16x128xf32>
    %c0_3 = arith.constant 0 : index
    %c0_4 = arith.constant 0 : index
    %3 = vector.load %arg3[%c0_3, %c0_4] : memref<16x1xf32, #tpu.memory_space<vmem>>, vector<16x1xf32>
    %4 = vector.broadcast %3 : vector<16x1xf32> to vector<16x128xf32>
    %5 = arith.addf %2, %4 : vector<16x128xf32>
    %cst_5 = arith.constant 0.000000e+00 : f32
    %6 = vector.broadcast %cst_5 : f32 to vector<16x128xf32>
    %7 = arith.maximumf %5, %6 : vector<16x128xf32>
    %c0_6 = arith.constant 0 : index
    %c0_7 = arith.constant 0 : index
    %8 = vector.load %arg4[%c0_6, %c0_7] : memref<8x16xf32, #tpu.memory_space<vmem>>, vector<8x16xf32>
    %cst_8 = arith.constant dense<0.000000e+00> : vector<8x128xf32>
    %9 = tpu.matmul %8, %7, %cst_8 {dimension_numbers = #tpu.dot_dimension_numbers<[1], [0], [0], [1], [0, 0, 1, 1], [], []>} : vector<8x16xf32>, vector<16x128xf32>, vector<8x128xf32> -> vector<8x128xf32>
    %c0_9 = arith.constant 0 : index
    %c0_10 = arith.constant 0 : index
    %10 = vector.load %arg5[%c0_9, %c0_10] : memref<8x1xf32, #tpu.memory_space<vmem>>, vector<8x1xf32>
    %11 = vector.broadcast %10 : vector<8x1xf32> to vector<8x128xf32>
    %12 = arith.addf %9, %11 : vector<8x128xf32>
    %c0_11 = arith.constant 0 : index
    %c0_12 = arith.constant 0 : index
    %13 = vector.load %arg6[%c0_11, %c0_12] : memref<8x128xf32, #tpu.memory_space<vmem>>, vector<8x128xf32>
    tpu.vector_store %arg6[%c0_11, %c0_12], %12 {strides = array<i32>} : memref<8x128xf32, #tpu.memory_space<vmem>>, vector<8x128xf32>,
    return
  }
  func.func @transform_0(%arg0: i32) -> (i32, i32) {
    %c0_i32 = arith.constant 0 : i32
    %c0_i32_0 = arith.constant 0 : i32
    %c0_i32_1 = arith.constant 0 : i32
    return %c0_i32, %c0_i32_0 : i32, i32
  }
  func.func @transform_1(%arg0: i32) -> (i32, i32) {
    %c0_i32 = arith.constant 0 : i32
    %c0_i32_0 = arith.constant 0 : i32
    %c0_i32_1 = arith.constant 0 : i32
    return %c0_i32, %c0_i32_0 : i32, i32
  }
  func.func @transform_2(%arg0: i32) -> (i32, i32) {
    %c0_i32 = arith.constant 0 : i32
    %c0_i32_0 = arith.constant 0 : i32
    %c0_i32_1 = arith.constant 0 : i32
    return %c0_i32, %c0_i32_0 : i32, i32
  }
  func.func @transform_3(%arg0: i32) -> (i32, i32) {
    %c0_i32 = arith.constant 0 : i32
    %c0_i32_0 = arith.constant 0 : i32
    %c0_i32_1 = arith.constant 0 : i32
    return %c0_i32, %c0_i32_0 : i32, i32
  }
  func.func @transform_4(%arg0: i32) -> (i32, i32) {
    %c0_i32 = arith.constant 0 : i32
    %c0_i32_0 = arith.constant 0 : i32
    %c0_i32_1 = arith.constant 0 : i32
    return %c0_i32, %c0_i32_0 : i32, i32
  }
  func.func @transform_5(%arg0: i32) -> (i32, i32) {
    %c0_i32 = arith.constant 0 : i32
    %c0_i32_0 = arith.constant 0 : i32
    %c0_i32_1 = arith.constant 0 : i32
    return %c0_i32, %c0_i32_0 : i32, i32
  }
}

</mosaic_0001>

<llo_original>
// kernel: intention_classifier_forward.1
$region0: #{intention_classifier_forward.1}
  #allocation0 [shape = 'u32[]', space=smem, size = 0x4, offset = 0x4, fixed_abs, tag = 'smem constant byte address 0x4 - core index']
  #allocation1 [shape = 'u32[144,128]{1,0:T(1,128)}', space=vmem, size = 0x12000, scoped, tag = 'internal scratch']
  %s0 = inlined_call_operand.vmem [shape: f32[128,32], index: 0, kind: input, shape index: {}]
  %s1 = inlined_call_operand.vmem [shape: f32[16,32], index: 1, kind: input, shape index: {}]
  %s2 = inlined_call_operand.vmem [shape: f32[16,1], index: 2, kind: input, shape index: {}]
  %s3 = inlined_call_operand.vmem [shape: f32[8,16], index: 3, kind: input, shape index: {}]
  %s4 = inlined_call_operand.vmem [shape: f32[8,1], index: 4, kind: input, shape index: {}]
  %s5 = inlined_call_operand.hbm [shape: f32[8,128], index: 5, kind: output, shape index: {}]
  %s6 = sld [smem:[#allocation0]]
  $region30: #{intention_classifier_forward.1} parent=0
    _
  %s8 = ssub.s32 1, %s6
  %s9 = scalar_select 0, %s8, %s6
  $region1: #{intention_classifier_forward.1} parent=0
    #allocation2 [shape = 'u8[4096]{0}', space=vmem, size = 0x1000, scoped, tag = 'output window, operand 0, single buffered']
    #allocation3 [shape = 's32[1]{0}', space=sflag, size = 0x4, scoped, tag = 'scoped memory for intention_classifier_forward.1']
    %10 = vsyncpa [#allocation3], 0
    // Predicated region
    $region2: #{intention_classifier_forward.1} parent=1 // pred_check
      _
    $region3: #{intention_classifier_forward.1} parent=1 // pred_check_branch
      %12 = sbr.rel (0) target = $region5
    $region4: #{intention_classifier_forward.1} parent=1 // pred_region
      _
    $region5: #{intention_classifier_forward.1} parent=1 // pred_fallthru
      _
    // Predicated region
    $region6: #{intention_classifier_forward.1} parent=1 // pred_check
      _
    $region7: #{intention_classifier_forward.1} parent=1 // pred_check_branch
      %14 = sbr.rel (0) target = $region9
    $region8: #{intention_classifier_forward.1} parent=1 // pred_region
      _
    $region9: #{intention_classifier_forward.1} parent=1 // pred_fallthru
      _
    // Predicated region
    $region10: #{intention_classifier_forward.1} parent=1 // pred_check
      _
    $region11: #{intention_classifier_forward.1} parent=1 // pred_check_branch
      %16 = sbr.rel (0) target = $region13
    $region12: #{intention_classifier_forward.1} parent=1 // pred_region
      _
    $region13: #{intention_classifier_forward.1} parent=1 // pred_fallthru
      _
    // Predicated region
    $region14: #{intention_classifier_forward.1} parent=1 // pred_check
      _
    $region15: #{intention_classifier_forward.1} parent=1 // pred_check_branch
      %18 = sbr.rel (0) target = $region17
    $region16: #{intention_classifier_forward.1} parent=1 // pred_region
      _
    $region17: #{intention_classifier_forward.1} parent=1 // pred_fallthru
      _
    // Predicated region
    $region18: #{intention_classifier_forward.1} parent=1 // pred_check
      _
    $region19: #{intention_classifier_forward.1} parent=1 // pred_check_branch
      %20 = sbr.rel (0) target = $region21
    $region20: #{intention_classifier_forward.1} parent=1 // pred_region
      _
    $region21: #{intention_classifier_forward.1} parent=1 // pred_fallthru
      _
    %v21 = vld [vmem:[%s1] sm:$0xff]
    %v22 = vld [vmem:[%s1 + $0x8] sm:$0xff]
    %v23 = vld [vmem:[%s0] sm:$0xff]
    %v24 = vld [vmem:[%s0 + $0x8] sm:$0xff]
    %v25 = vld [vmem:[%s0 + $0x10] sm:$0xff]
    %v26 = vld [vmem:[%s0 + $0x18] sm:$0xff]
    %v27 = vld [vmem:[%s0 + $0x20] sm:$0xff]
    %v28 = vld [vmem:[%s0 + $0x28] sm:$0xff]
    %v29 = vld [vmem:[%s0 + $0x30] sm:$0xff]
    %v30 = vld [vmem:[%s0 + $0x38] sm:$0xff]
    %v31 = vld [vmem:[%s0 + $0x40] sm:$0xff]
    %v32 = vld [vmem:[%s0 + $0x48] sm:$0xff]
    %v33 = vld [vmem:[%s0 + $0x50] sm:$0xff]
    %v34 = vld [vmem:[%s0 + $0x58] sm:$0xff]
    %v35 = vld [vmem:[%s0 + $0x60] sm:$0xff]
    %v36 = vld [vmem:[%s0 + $0x68] sm:$0xff]
    %v37 = vld [vmem:[%s0 + $0x70] sm:$0xff]
    %v38 = vld [vmem:[%s0 + $0x78] sm:$0xff]
    %v39 = vld [vmem:[%s2] sm:$0xff]
    %v40 = vld [vmem:[%s2 + $0x8] sm:$0xff]
    %42 = vset.pattern.permute.xlu0 0
    %43 = vperm.xlu0 %42, %v39
    %v44 = vpop.permute.xlu0 %43
    %47 = vset.pattern.permute.xlu0 0
    %48 = vperm.xlu0 %47, %v40
    %v49 = vpop.permute.xlu0 %48
    %vm51 = vcmask 261120
    %v53 = vsel %vm51, %v21, 0
    %v56 = vsel %vm51, %v22, 0
    %v59 = vsel %vm51, %v23, 0
    %v62 = vsel %vm51, %v24, 0
    %v65 = vsel %vm51, %v25, 0
    %v68 = vsel %vm51, %v26, 0
    %v71 = vsel %vm51, %v27, 0
    %v74 = vsel %vm51, %v28, 0
    %v77 = vsel %vm51, %v29, 0
    %v80 = vsel %vm51, %v30, 0
    %v83 = vsel %vm51, %v31, 0
    %v86 = vsel %vm51, %v32, 0
    %v89 = vsel %vm51, %v33, 0
    %v92 = vsel %vm51, %v34, 0
    %v95 = vsel %vm51, %v35, 0
    %v98 = vsel %vm51, %v36, 0
    %v101 = vsel %vm51, %v37, 0
    %v104 = vsel %vm51, %v38, 0
    %106 = vmatprep.subr.mxu0 0.0
    %107 = vmatpush1.xpose.msra.mxu0 %v59
    %108 = vmatprep.subr.mxu0 0.0
    %109 = vmatpush1.xpose.msra.mxu0 %v62
    %110 = vmatprep.subr.mxu0 0.0
    %111 = vmatpush1.xpose.msra.mxu0 %v65
    %112 = vmatprep.subr.mxu0 0.0
    %113 = vmatpush1.xpose.msra.mxu0 %v68
    %114 = vmatprep.subr.mxu0 0.0
    %115 = vmatpush1.xpose.msra.mxu0 %v71
    %116 = vmatprep.subr.mxu0 0.0
    %117 = vmatpush1.xpose.msra.mxu0 %v74
    %118 = vmatprep.subr.mxu0 0.0
    %119 = vmatpush1.xpose.msra.mxu0 %v77
    %120 = vmatprep.subr.mxu0 0.0
    %121 = vmatpush1.xpose.msra.mxu0 %v80
    %122 = vmatprep.subr.mxu0 0.0
    %123 = vmatpush1.xpose.msra.mxu0 %v83
    %124 = vmatprep.subr.mxu0 0.0
    %125 = vmatpush1.xpose.msra.mxu0 %v86
    %126 = vmatprep.subr.mxu0 0.0
    %127 = vmatpush1.xpose.msra.mxu0 %v89
    %128 = vmatprep.subr.mxu0 0.0
    %129 = vmatpush1.xpose.msra.mxu0 %v92
    %130 = vmatprep.subr.mxu0 0.0
    %131 = vmatpush1.xpose.msra.mxu0 %v95
    %132 = vmatprep.subr.mxu0 0.0
    %133 = vmatpush1.xpose.msra.mxu0 %v98
    %134 = vmatprep.subr.mxu0 0.0
    %135 = vmatpush1.xpose.msra.mxu0 %v101
    %136 = vmatprep.subr.mxu0 0.0
    %137 = vmatpush1.xpose.msra.mxu0 %v104
    %138 = vmatprep.subr.mxu0 0.0
    %139 = vmatpush1.xpose.msra.mxu0 0.0
    %140 = vmatprep.subr.mxu0 0.0
    %141 = vmatpush1.xpose.msra.mxu0 0.0
    %142 = vmatprep.subr.mxu0 0.0
    %143 = vmatpush1.xpose.msra.mxu0 0.0
    %144 = vmatprep.subr.mxu0 0.0
    %145 = vmatpush1.xpose.msra.mxu0 0.0
    %146 = vmatprep.subr.mxu0 0.0
    %147 = vmatpush1.xpose.msra.mxu0 0.0
    %148 = vmatprep.subr.mxu0 0.0
    %149 = vmatpush1.xpose.msra.mxu0 0.0
    %150 = vmatprep.subr.mxu0 0.0
    %151 = vmatpush1.xpose.msra.mxu0 0.0
    %152 = vmatprep.subr.mxu0 0.0
    %153 = vmatpush1.xpose.msra.mxu0 0.0
    %154 = vmatprep.subr.mxu0 0.0
    %155 = vmatpush1.xpose.msra.mxu0 0.0
    %156 = vmatprep.subr.mxu0 0.0
    %157 = vmatpush1.xpose.msra.mxu0 0.0
    %158 = vmatprep.subr.mxu0 0.0
    %159 = vmatpush1.xpose.msra.mxu0 0.0
    %160 = vmatprep.subr.mxu0 0.0
    %161 = vmatpush1.xpose.msra.mxu0 0.0
    %162 = vmatprep.subr.mxu0 0.0
    %163 = vmatpush1.xpose.msra.mxu0 0.0
    %164 = vmatprep.subr.mxu0 0.0
    %165 = vmatpush1.xpose.msra.mxu0 0.0
    %166 = vmatprep.subr.mxu0 0.0
    %167 = vmatpush1.xpose.msra.mxu0 0.0
    %168 = vmatprep.subr.mxu0 0.0
    %169 = vmatpush1.xpose.msra.mxu0 0.0
    %170 = vmatprep.mubr.f32.mxu0 0.0
    %171 = vmatmul.mubr.f32.gmra.mrb[0].mxu0 %v53
    %v172 = vpop.f32.mrb[0].mxu0
    %v173 = vadd.f32 %v44, %v172
    %v174 = vpop.f32.mrb[0].mxu0
    %175 = vmatprep.mubr.f32.mxu0 0.0
    %176 = vmatmul.mubr.f32.gmra.mrb[0].mxu0 %v56
    %v177 = vpop.f32.mrb[0].mxu0
    %v178 = vadd.f32 %v49, %v177
    %v179 = vpop.f32.mrb[0].mxu0
    %180 = vdwg.mxu0
    %v181 = vmax.f32 %v173, 0.0
    %v182 = vmax.f32 %v178, 0.0
    %v183 = vld [vmem:[%s3] sm:$0xff]
    %v184 = vld [vmem:[%s4] sm:$0xff]
    %186 = vset.pattern.permute.xlu0 0
    %187 = vperm.xlu0 %186, %v184
    %v188 = vpop.permute.xlu0 %187
    %vm190 = vcmask 130048
    %v192 = vsel %vm190, %v183, 0
    %194 = vmatprep.subr.mxu0 0.0
    %195 = vmatpush1.msra.mxu0 %v181
    %196 = vmatprep.subr.mxu0 0.0
    %197 = vmatpush1.msra.mxu0 %v182
    %198 = vmatprep.subr.mxu0 0.0
    %199 = vmatpush1.msra.mxu0 0.0
    %200 = vmatprep.subr.mxu0 0.0
    %201 = vmatpush1.msra.mxu0 0.0
    %202 = vmatprep.subr.mxu0 0.0
    %203 = vmatpush1.msra.mxu0 0.0
    %204 = vmatprep.subr.mxu0 0.0
    %205 = vmatpush1.msra.mxu0 0.0
    %206 = vmatprep.subr.mxu0 0.0
    %207 = vmatpush1.msra.mxu0 0.0
    %208 = vmatprep.subr.mxu0 0.0
    %209 = vmatpush1.msra.mxu0 0.0
    %210 = vmatprep.subr.mxu0 0.0
    %211 = vmatpush1.msra.mxu0 0.0
    %212 = vmatprep.subr.mxu0 0.0
    %213 = vmatpush1.msra.mxu0 0.0
    %214 = vmatprep.subr.mxu0 0.0
    %215 = vmatpush1.msra.mxu0 0.0
    %216 = vmatprep.subr.mxu0 0.0
    %217 = vmatpush1.msra.mxu0 0.0
    %218 = vmatprep.subr.mxu0 0.0
    %219 = vmatpush1.msra.mxu0 0.0
    %220 = vmatprep.subr.mxu0 0.0
    %221 = vmatpush1.msra.mxu0 0.0
    %222 = vmatprep.subr.mxu0 0.0
    %223 = vmatpush1.msra.mxu0 0.0
    %224 = vmatprep.subr.mxu0 0.0
    %225 = vmatpush1.msra.mxu0 0.0
    %226 = vmatprep.subr.mxu0 0.0
    %227 = vmatpush1.msra.mxu0 0.0
    %228 = vmatprep.subr.mxu0 0.0
    %229 = vmatpush1.msra.mxu0 0.0
    %230 = vmatprep.subr.mxu0 0.0
    %231 = vmatpush1.msra.mxu0 0.0
    %232 = vmatprep.subr.mxu0 0.0
    %233 = vmatpush1.msra.mxu0 0.0
    %234 = vmatprep.subr.mxu0 0.0
    %235 = vmatpush1.msra.mxu0 0.0
    %236 = vmatprep.subr.mxu0 0.0
    %237 = vmatpush1.msra.mxu0 0.0
    %238 = vmatprep.subr.mxu0 0.0
    %239 = vmatpush1.msra.mxu0 0.0
    %240 = vmatprep.subr.mxu0 0.0
    %241 = vmatpush1.msra.mxu0 0.0
    %242 = vmatprep.subr.mxu0 0.0
    %243 = vmatpush1.msra.mxu0 0.0
    %244 = vmatprep.subr.mxu0 0.0
    %245 = vmatpush1.msra.mxu0 0.0
    %246 = vmatprep.subr.mxu0 0.0
    %247 = vmatpush1.msra.mxu0 0.0
    %248 = vmatprep.subr.mxu0 0.0
    %249 = vmatpush1.msra.mxu0 0.0
    %250 = vmatprep.subr.mxu0 0.0
    %251 = vmatpush1.msra.mxu0 0.0
    %252 = vmatprep.subr.mxu0 0.0
    %253 = vmatpush1.msra.mxu0 0.0
    %254 = vmatprep.subr.mxu0 0.0
    %255 = vmatpush1.msra.mxu0 0.0
    %256 = vmatprep.subr.mxu0 0.0
    %257 = vmatpush1.msra.mxu0 0.0
    %258 = vmatprep.mubr.f32.mxu0 0.0
    %259 = vmatmul.mubr.f32.gmra.mrb[0].mxu0 %v192
    %v260 = vpop.f32.mrb[0].mxu0
    %v261 = vadd.f32 %v188, %v260
    %v262 = vpop.f32.mrb[0].mxu0
    %263 = vdwg.mxu0
    %264 = vst [vmem:[#allocation2] sm:$0xff] %v261
    // Predicated region
    $region22: #{intention_classifier_forward.1} parent=1 // pred_check
      _
    $region23: #{intention_classifier_forward.1} parent=1 // pred_check_branch
      %266 = sbr.rel (0) target = $region25
    $region24: #{intention_classifier_forward.1} parent=1 // pred_region
      %s268 = ssub.s32 128, 128
      %269 = vsyncadd [#allocation3], %s268
      %s271 = sshll.u32 [#allocation2], 4
      %s272 = int_to_ptr.vmem [resolvable:$true] %s271
      %274 = dma.vmem_to_hbm [thread:$0]  %s272, 128, %s5, [#allocation3]
    $region25: #{intention_classifier_forward.1} parent=1 // pred_fallthru
      _
    // Predicated region
    $region26: #{intention_classifier_forward.1} parent=1 // pred_check
      _
    $region27: #{intention_classifier_forward.1} parent=1 // pred_check_branch
      %276 = sbr.rel (0) target = $region29
    $region28: #{intention_classifier_forward.1} parent=1 // pred_region
      %277 = dma.done [#allocation3], 128
    $region29: #{intention_classifier_forward.1} parent=1 // pred_fallthru
      _
    %278 = vsyncpa [#allocation3], 1

</llo_original>
